<compile_context>
chip_gen: v7x
topology: tpu7x:2x2x1
jax: 0.10.0
libtpu: 0.0.40
codegen_flags: <defaults>
</compile_context>

<pallas_src>
import functools

import jax
import jax.numpy as jnp
from jax.experimental import pallas as pl
from jax.experimental.pallas import tpu as pltpu


def _round_up(x, m):
    return ((x + m - 1) // m) * m


def _gather_batched_kernel(idx_ref, table_ref, out_ref, *, tb):
    """Gather `tb` rows from the VMEM-resident table into one output block.

    idx_ref:   (B_pad,) int32 in SMEM (scalar prefetch)
    table_ref: (num_parts, HW_pad) whole latent table, resident in VMEM
    out_ref:   (tb, HW_pad) lane-dense output block for this grid step
    """
    base = pl.program_id(0) * tb
    for j in range(tb):  # static unroll; tb is small / bounded
        row = idx_ref[base + j]
        out_ref[pl.ds(j, 1), :] = table_ref[pl.ds(row, 1), :]


def _gather_per_index_kernel(idx_ref, lat_ref, out_ref):
    # Fallback path: the gather is done by the data-dependent input index_map,
    # the body is just a VMEM tile copy.
    del idx_ref
    out_ref[...] = lat_ref[...]


def latent_variables_forward(
    latents,
    indices,
    *,
    max_batch_block=64,
    vmem_table_budget_bytes=16 * 1024 * 1024,
):
    """latents: (num_parts, 1, H, W); indices: int array -> indices.shape + (1, H, W)."""
    num_parts, one, H, W = latents.shape
    assert one == 1
    HW = H * W

    idx_shape = indices.shape
    idx_flat = jnp.asarray(indices, jnp.int32).reshape(-1)
    # torch-style negative indexing, then clamp: an out-of-range index would
    # otherwise become an unchecked OOB VMEM access / DMA.
    idx_flat = jnp.where(idx_flat < 0, idx_flat + num_parts, idx_flat)
    idx_flat = jnp.clip(idx_flat, 0, num_parts - 1)
    B = int(idx_flat.shape[0])

    # Lane-dense table layout: (num_parts, H*W), padded to a 128-lane multiple
    # so all vector loads/stores are unmasked full-width ops.
    table = latents.reshape(num_parts, HW)
    HW_pad = _round_up(HW, 128)
    if HW_pad != HW:
        table = jnp.pad(table, ((0, 0), (0, HW_pad - HW)))

    itemsize = jnp.dtype(latents.dtype).itemsize
    table_bytes = num_parts * HW_pad * itemsize

    if table_bytes <= vmem_table_budget_bytes:
        # ---- Resident-table path: table in VMEM once, batched output blocks ----
        tb = min(_round_up(B, 8), _round_up(max_batch_block, 8))
        n_blocks = pl.cdiv(B, tb)
        b_pad = n_blocks * tb
        if b_pad != B:
            idx_padded = jnp.concatenate(
                [idx_flat, jnp.zeros((b_pad - B,), jnp.int32)]
            )
        else:
            idx_padded = idx_flat

        out_block_bytes = tb * HW_pad * itemsize
        # Size scoped VMEM explicitly (v7x physical VMEM is only 64 MiB).
        vmem_need = table_bytes + 2 * out_block_bytes + (2 << 20)
        vmem_limit = int(min(max(vmem_need, 16 << 20), 32 << 20))

        grid_spec = pltpu.PrefetchScalarGridSpec(
            num_scalar_prefetch=1,
            grid=(n_blocks,),
            in_specs=[
                # Whole table, constant block index -> DMA'd once, stays resident.
                pl.BlockSpec((num_parts, HW_pad), lambda i, idx_ref: (0, 0)),
            ],
            out_specs=pl.BlockSpec((tb, HW_pad), lambda i, idx_ref: (i, 0)),
        )

        out2d = pl.pallas_call(
            functools.partial(_gather_batched_kernel, tb=tb),
            out_shape=jax.ShapeDtypeStruct((b_pad, HW_pad), latents.dtype),
            grid_spec=grid_spec,
            compiler_params=pltpu.CompilerParams(
                dimension_semantics=("parallel",),  # disjoint output blocks
                vmem_limit_bytes=vmem_limit,
            ),
        )(idx_padded, table)
        out2d = out2d[:B]
    else:
        # ---- Fallback for tables too large to keep resident in VMEM ----
        grid_spec = pltpu.PrefetchScalarGridSpec(
            num_scalar_prefetch=1,
            grid=(B,),
            in_specs=[
                pl.BlockSpec(
                    (1, HW_pad),
                    lambda i, idx_ref: (idx_ref[i], 0),
                    pipeline_mode=pl.Buffered(3),  # hide per-index HBM latency
                ),
            ],
            out_specs=pl.BlockSpec((1, HW_pad), lambda i, idx_ref: (i, 0)),
        )
        out2d = pl.pallas_call(
            _gather_per_index_kernel,
            out_shape=jax.ShapeDtypeStruct((B, HW_pad), latents.dtype),
            grid_spec=grid_spec,
            compiler_params=pltpu.CompilerParams(
                dimension_semantics=("arbitrary",)
            ),
        )(idx_flat, table)

    if HW_pad != HW:
        out2d = out2d[:, :HW]
    return out2d.reshape(*idx_shape, 1, H, W)


if __name__ == "__main__":
    # Deterministic parameter init (mirrors torch.randn(num_parts, 1, *latent_dim)).
    num_parts = 8
    latent_dim = (16, 32)  # (H, W); H*W = 512 -> lane-dense
    key = jax.random.PRNGKey(0)
    k_lat, k_idx = jax.random.split(key)
    latents = jax.random.normal(
        k_lat, (num_parts, 1, *latent_dim), dtype=jnp.float32
    )

    # Example batch of part indices (includes repeats in general).
    indices = jax.random.randint(k_idx, (4,), 0, num_parts, dtype=jnp.int32)

    out = latent_variables_forward(latents, indices)
    out = jax.block_until_ready(out)

    # Verify against the plain-JAX reference of latents[indices] (exact copy).
    ref = latents[indices]
    assert out.shape == (indices.shape[0], 1, *latent_dim)
    assert jnp.array_equal(out, ref)

    print("KERNEL_OK")
</pallas_src>

<mosaic_0001>
module attributes {stable_mosaic.version = 11 : i64} {
  func.func @_gather_batched_kernel(%arg0: i32, %arg1: memref<8xi32, #tpu.memory_space<smem>>, %arg2: memref<8x512xf32, #tpu.memory_space<vmem>>, %arg3: memref<8x512xf32, #tpu.memory_space<vmem>>) attributes {dimension_semantics = [#tpu.dimension_semantics<parallel>], iteration_bounds = array<i64: 1>, scalar_prefetch = 1 : i64, scratch_operands = 0 : i64, tpu.core_type = #tpu.core_type<tc>, window_params = [{pipeline_mode = #tpu.pipeline_mode<synchronous>, transform_indices = @transform_0, window_bounds = array<i64: 8, 512>}, {transform_indices = @transform_1, window_bounds = array<i64: 8, 512>}]} {
    %c8_i32 = arith.constant 8 : i32
    %0 = arith.muli %arg0, %c8_i32 : i32
    %c0_i32 = arith.constant 0 : i32
    %1 = arith.addi %0, %c0_i32 : i32
    %2 = arith.index_cast %1 : i32 to index
    %3 = memref.load %arg1[%2] : memref<8xi32, #tpu.memory_space<smem>>
    %4 = arith.index_cast %3 : i32 to index
    %c0 = arith.constant 0 : index
    %5 = vector.load %arg2[%4, %c0] : memref<8x512xf32, #tpu.memory_space<vmem>>, vector<1x512xf32>
    %c0_0 = arith.constant 0 : index
    %c0_1 = arith.constant 0 : index
    %6 = vector.load %arg3[%c0_0, %c0_1] : memref<8x512xf32, #tpu.memory_space<vmem>>, vector<1x512xf32>
    tpu.vector_store %arg3[%c0_0, %c0_1], %5 {strides = array<i32>} : memref<8x512xf32, #tpu.memory_space<vmem>>, vector<1x512xf32>,
    %c1_i32 = arith.constant 1 : i32
    %7 = arith.addi %0, %c1_i32 : i32
    %8 = arith.index_cast %7 : i32 to index
    %9 = memref.load %arg1[%8] : memref<8xi32, #tpu.memory_space<smem>>
    %10 = arith.index_cast %9 : i32 to index
    %c0_2 = arith.constant 0 : index
    %11 = vector.load %arg2[%10, %c0_2] : memref<8x512xf32, #tpu.memory_space<vmem>>, vector<1x512xf32>
    %c1 = arith.constant 1 : index
    %c0_3 = arith.constant 0 : index
    %12 = vector.load %arg3[%c1, %c0_3] : memref<8x512xf32, #tpu.memory_space<vmem>>, vector<1x512xf32>
    tpu.vector_store %arg3[%c1, %c0_3], %11 {strides = array<i32>} : memref<8x512xf32, #tpu.memory_space<vmem>>, vector<1x512xf32>,
    %c2_i32 = arith.constant 2 : i32
    %13 = arith.addi %0, %c2_i32 : i32
    %14 = arith.index_cast %13 : i32 to index
    %15 = memref.load %arg1[%14] : memref<8xi32, #tpu.memory_space<smem>>
    %16 = arith.index_cast %15 : i32 to index
    %c0_4 = arith.constant 0 : index
    %17 = vector.load %arg2[%16, %c0_4] : memref<8x512xf32, #tpu.memory_space<vmem>>, vector<1x512xf32>
    %c2 = arith.constant 2 : index
    %c0_5 = arith.constant 0 : index
    %18 = vector.load %arg3[%c2, %c0_5] : memref<8x512xf32, #tpu.memory_space<vmem>>, vector<1x512xf32>
    tpu.vector_store %arg3[%c2, %c0_5], %17 {strides = array<i32>} : memref<8x512xf32, #tpu.memory_space<vmem>>, vector<1x512xf32>,
    %c3_i32 = arith.constant 3 : i32
    %19 = arith.addi %0, %c3_i32 : i32
    %20 = arith.index_cast %19 : i32 to index
    %21 = memref.load %arg1[%20] : memref<8xi32, #tpu.memory_space<smem>>
    %22 = arith.index_cast %21 : i32 to index
    %c0_6 = arith.constant 0 : index
    %23 = vector.load %arg2[%22, %c0_6] : memref<8x512xf32, #tpu.memory_space<vmem>>, vector<1x512xf32>
    %c3 = arith.constant 3 : index
    %c0_7 = arith.constant 0 : index
    %24 = vector.load %arg3[%c3, %c0_7] : memref<8x512xf32, #tpu.memory_space<vmem>>, vector<1x512xf32>
    tpu.vector_store %arg3[%c3, %c0_7], %23 {strides = array<i32>} : memref<8x512xf32, #tpu.memory_space<vmem>>, vector<1x512xf32>,
    %c4_i32 = arith.constant 4 : i32
    %25 = arith.addi %0, %c4_i32 : i32
    %26 = arith.index_cast %25 : i32 to index
    %27 = memref.load %arg1[%26] : memref<8xi32, #tpu.memory_space<smem>>
    %28 = arith.index_cast %27 : i32 to index
    %c0_8 = arith.constant 0 : index
    %29 = vector.load %arg2[%28, %c0_8] : memref<8x512xf32, #tpu.memory_space<vmem>>, vector<1x512xf32>
    %c4 = arith.constant 4 : index
    %c0_9 = arith.constant 0 : index
    %30 = vector.load %arg3[%c4, %c0_9] : memref<8x512xf32, #tpu.memory_space<vmem>>, vector<1x512xf32>
    tpu.vector_store %arg3[%c4, %c0_9], %29 {strides = array<i32>} : memref<8x512xf32, #tpu.memory_space<vmem>>, vector<1x512xf32>,
    %c5_i32 = arith.constant 5 : i32
    %31 = arith.addi %0, %c5_i32 : i32
    %32 = arith.index_cast %31 : i32 to index
    %33 = memref.load %arg1[%32] : memref<8xi32, #tpu.memory_space<smem>>
    %34 = arith.index_cast %33 : i32 to index
    %c0_10 = arith.constant 0 : index
    %35 = vector.load %arg2[%34, %c0_10] : memref<8x512xf32, #tpu.memory_space<vmem>>, vector<1x512xf32>
    %c5 = arith.constant 5 : index
    %c0_11 = arith.constant 0 : index
    %36 = vector.load %arg3[%c5, %c0_11] : memref<8x512xf32, #tpu.memory_space<vmem>>, vector<1x512xf32>
    tpu.vector_store %arg3[%c5, %c0_11], %35 {strides = array<i32>} : memref<8x512xf32, #tpu.memory_space<vmem>>, vector<1x512xf32>,
    %c6_i32 = arith.constant 6 : i32
    %37 = arith.addi %0, %c6_i32 : i32
    %38 = arith.index_cast %37 : i32 to index
    %39 = memref.load %arg1[%38] : memref<8xi32, #tpu.memory_space<smem>>
    %40 = arith.index_cast %39 : i32 to index
    %c0_12 = arith.constant 0 : index
    %41 = vector.load %arg2[%40, %c0_12] : memref<8x512xf32, #tpu.memory_space<vmem>>, vector<1x512xf32>
    %c6 = arith.constant 6 : index
    %c0_13 = arith.constant 0 : index
    %42 = vector.load %arg3[%c6, %c0_13] : memref<8x512xf32, #tpu.memory_space<vmem>>, vector<1x512xf32>
    tpu.vector_store %arg3[%c6, %c0_13], %41 {strides = array<i32>} : memref<8x512xf32, #tpu.memory_space<vmem>>, vector<1x512xf32>,
    %c7_i32 = arith.constant 7 : i32
    %43 = arith.addi %0, %c7_i32 : i32
    %44 = arith.index_cast %43 : i32 to index
    %45 = memref.load %arg1[%44] : memref<8xi32, #tpu.memory_space<smem>>
    %46 = arith.index_cast %45 : i32 to index
    %c0_14 = arith.constant 0 : index
    %47 = vector.load %arg2[%46, %c0_14] : memref<8x512xf32, #tpu.memory_space<vmem>>, vector<1x512xf32>
    %c7 = arith.constant 7 : index
    %c0_15 = arith.constant 0 : index
    %48 = vector.load %arg3[%c7, %c0_15] : memref<8x512xf32, #tpu.memory_space<vmem>>, vector<1x512xf32>
    tpu.vector_store %arg3[%c7, %c0_15], %47 {strides = array<i32>} : memref<8x512xf32, #tpu.memory_space<vmem>>, vector<1x512xf32>,
    return
  }
  func.func @transform_0(%arg0: i32, %arg1: memref<8xi32, #tpu.memory_space<smem>>) -> (i32, i32) {
    %c0_i32 = arith.constant 0 : i32
    %c0_i32_0 = arith.constant 0 : i32
    %c0_i32_1 = arith.constant 0 : i32
    return %c0_i32, %c0_i32_0 : i32, i32
  }
  func.func @transform_1(%arg0: i32, %arg1: memref<8xi32, #tpu.memory_space<smem>>) -> (i32, i32) {
    %c0_i32 = arith.constant 0 : i32
    %c0_i32_0 = arith.constant 0 : i32
    return %arg0, %c0_i32 : i32, i32
  }
}

</mosaic_0001>

<llo_original>
// kernel: tpu_custom_call.1
$region0: #{tpu_custom_call.1}
  #allocation0 [shape = 'u32[]', space=smem, size = 0x4, offset = 0x4, fixed_abs, tag = 'smem constant byte address 0x4 - core index']
  #allocation1 [shape = 'u32[144,128]{1,0:T(1,128)}', space=vmem, size = 0x12000, scoped, tag = 'internal scratch']
  #allocation2 [shape = 's32[1]{0}', space=sflag, size = 0x4, scoped, tag = 'scoped memory for tpu_custom_call.1']
  #allocation3 [shape = 'u8[512]{0}', space=smem, size = 0x200, scoped, tag = 'prefetched SMEM operand 0']
  %s0 = inlined_call_operand.hbm [shape: s32[8], index: 0, kind: input, shape index: {}]
  %s1 = inlined_call_operand.hbm [shape: f32[8,512], index: 1, kind: input, shape index: {}]
  %s2 = inlined_call_operand.hbm [shape: f32[8,512], index: 2, kind: output, shape index: {}]
  %s3 = sld [smem:[#allocation0]]
  $region18: #{tpu_custom_call.1} parent=0
    _
  %s5 = ssub.s32 1, %s3
  %s6 = scalar_select 0, %s5, %s3
  %8 = dma.hbm_to_smem %s0, 16, [#allocation3], [#allocation2]
  %9 = dma.done [#allocation2], 16
  %10 = sfence
  $region1: #{tpu_custom_call.1} parent=0
    #allocation4 [shape = 'u8[16384]{0}', space=vmem, size = 0x4000, scoped, tag = 'input window, operand 1, single buffered']
    #allocation5 [shape = 's32[1]{0}', space=sflag, size = 0x4, scoped, tag = 'scoped memory for tpu_custom_call.1']
    #allocation6 [shape = 's32[1]{0}', space=sflag, size = 0x4, scoped, tag = 'scoped memory for tpu_custom_call.1']
    #allocation7 [shape = 'u8[16384]{0}', space=vmem, size = 0x4000, scoped, tag = 'output window, operand 0, single buffered']
    %11 = vsyncpa [#allocation5], 0
    %12 = vsyncpa [#allocation6], 0
    // Predicated region
    $region2: #{tpu_custom_call.1} parent=1 // pred_check
      _
    $region3: #{tpu_custom_call.1} parent=1 // pred_check_branch
      %14 = sbr.rel (0) target = $region5
    $region4: #{tpu_custom_call.1} parent=1 // pred_region
      %s16 = ssub.s32 512, 512
      %17 = vsyncadd [#allocation5], %s16
      %s19 = sshll.u32 [#allocation4], 4
      %s20 = int_to_ptr.vmem [resolvable:$true] %s19
      %22 = dma.hbm_to_vmem [thread:$0]  %s1, 512, %s20, [#allocation5]
    $region5: #{tpu_custom_call.1} parent=1 // pred_fallthru
      _
    // Predicated region
    $region6: #{tpu_custom_call.1} parent=1 // pred_check
      _
    $region7: #{tpu_custom_call.1} parent=1 // pred_check_branch
      %24 = sbr.rel (0) target = $region9
    $region8: #{tpu_custom_call.1} parent=1 // pred_region
      %25 = dma.done [#allocation5], 512
    $region9: #{tpu_custom_call.1} parent=1 // pred_fallthru
      _
    %s26 = smul.u32 0, 8
    %s27 = sld [smem:[#allocation3 + %s26]]
    %s28 = sshra.s32 %s27, 3
    %s29 = sand.u32 %s27, 7
    %s30 = sshra.s32 %s27, 3
    %s31 = sand.u32 %s27, 7
    %s32 = smul.u32 %s28, 4
    %s33 = smul.u32 %s32, 8
    %s34 = sadd.s32 %s33, %s31
    %s35 = scalar_lea.vmem [#allocation4], %s34
    %v36 = vld [vmem:[%s35] ss:$8 sm:$0xf]
    %v37 = vlaneseq
    %vm38 = vcmp.ge.s32.totalorder %v37, 0
    %vm39 = vcmp.lt.s32.totalorder %v37, 512
    %vm40 = vmand %vm38, %vm39
    %41 = vst.msk [vmem:[#allocation7] ss:$8 sm:$0xf] %vm40, %v36
    %42 = vst.msk [vmem:[#allocation7] ss:$8 sm:$0x0] %vm40, %v36
    %s43 = sadd.s32 %s26, 1
    %s44 = sld [smem:[#allocation3 + %s43]]
    %s45 = sshra.s32 %s44, 3
    %s46 = sand.u32 %s44, 7
    %s47 = sshra.s32 %s44, 3
    %s48 = sand.u32 %s44, 7
    %s49 = smul.u32 %s45, 4
    %s50 = smul.u32 %s49, 8
    %s51 = sadd.s32 %s50, %s48
    %s52 = scalar_lea.vmem [#allocation4], %s51
    %v53 = vld [vmem:[%s52] ss:$8 sm:$0xf]
    %s54 = scalar_lea.vmem [#allocation7], 1
    %55 = vst.msk [vmem:[%s54] ss:$8 sm:$0xf] %vm40, %v53
    %56 = vst.msk [vmem:[%s54] ss:$8 sm:$0x0] %vm40, %v53
    %s57 = sadd.s32 %s26, 2
    %s58 = sld [smem:[#allocation3 + %s57]]
    %s59 = sshra.s32 %s58, 3
    %s60 = sand.u32 %s58, 7
    %s61 = sshra.s32 %s58, 3
    %s62 = sand.u32 %s58, 7
    %s63 = smul.u32 %s59, 4
    %s64 = smul.u32 %s63, 8
    %s65 = sadd.s32 %s64, %s62
    %s66 = scalar_lea.vmem [#allocation4], %s65
    %v67 = vld [vmem:[%s66] ss:$8 sm:$0xf]
    %s68 = scalar_lea.vmem [#allocation7], 2
    %69 = vst.msk [vmem:[%s68] ss:$8 sm:$0xf] %vm40, %v67
    %70 = vst.msk [vmem:[%s68] ss:$8 sm:$0x0] %vm40, %v67
    %s71 = sadd.s32 %s26, 3
    %s72 = sld [smem:[#allocation3 + %s71]]
    %s73 = sshra.s32 %s72, 3
    %s74 = sand.u32 %s72, 7
    %s75 = sshra.s32 %s72, 3
    %s76 = sand.u32 %s72, 7
    %s77 = smul.u32 %s73, 4
    %s78 = smul.u32 %s77, 8
    %s79 = sadd.s32 %s78, %s76
    %s80 = scalar_lea.vmem [#allocation4], %s79
    %v81 = vld [vmem:[%s80] ss:$8 sm:$0xf]
    %s82 = scalar_lea.vmem [#allocation7], 3
    %83 = vst.msk [vmem:[%s82] ss:$8 sm:$0xf] %vm40, %v81
    %84 = vst.msk [vmem:[%s82] ss:$8 sm:$0x0] %vm40, %v81
    %s85 = sadd.s32 %s26, 4
    %s86 = sld [smem:[#allocation3 + %s85]]
    %s87 = sshra.s32 %s86, 3
    %s88 = sand.u32 %s86, 7
    %s89 = sshra.s32 %s86, 3
    %s90 = sand.u32 %s86, 7
    %s91 = smul.u32 %s87, 4
    %s92 = smul.u32 %s91, 8
    %s93 = sadd.s32 %s92, %s90
    %s94 = scalar_lea.vmem [#allocation4], %s93
    %v95 = vld [vmem:[%s94] ss:$8 sm:$0xf]
    %s96 = scalar_lea.vmem [#allocation7], 4
    %97 = vst.msk [vmem:[%s96] ss:$8 sm:$0xf] %vm40, %v95
    %98 = vst.msk [vmem:[%s96] ss:$8 sm:$0x0] %vm40, %v95
    %s99 = sadd.s32 %s26, 5
    %s100 = sld [smem:[#allocation3 + %s99]]
    %s101 = sshra.s32 %s100, 3
    %s102 = sand.u32 %s100, 7
    %s103 = sshra.s32 %s100, 3
    %s104 = sand.u32 %s100, 7
    %s105 = smul.u32 %s101, 4
    %s106 = smul.u32 %s105, 8
    %s107 = sadd.s32 %s106, %s104
    %s108 = scalar_lea.vmem [#allocation4], %s107
    %v109 = vld [vmem:[%s108] ss:$8 sm:$0xf]
    %s110 = scalar_lea.vmem [#allocation7], 5
    %111 = vst.msk [vmem:[%s110] ss:$8 sm:$0xf] %vm40, %v109
    %112 = vst.msk [vmem:[%s110] ss:$8 sm:$0x0] %vm40, %v109
    %s113 = sadd.s32 %s26, 6
    %s114 = sld [smem:[#allocation3 + %s113]]
    %s115 = sshra.s32 %s114, 3
    %s116 = sand.u32 %s114, 7
    %s117 = sshra.s32 %s114, 3
    %s118 = sand.u32 %s114, 7
    %s119 = smul.u32 %s115, 4
    %s120 = smul.u32 %s119, 8
    %s121 = sadd.s32 %s120, %s118
    %s122 = scalar_lea.vmem [#allocation4], %s121
    %v123 = vld [vmem:[%s122] ss:$8 sm:$0xf]
    %s124 = scalar_lea.vmem [#allocation7], 6
    %125 = vst.msk [vmem:[%s124] ss:$8 sm:$0xf] %vm40, %v123
    %126 = vst.msk [vmem:[%s124] ss:$8 sm:$0x0] %vm40, %v123
    %s127 = sadd.s32 %s26, 7
    %s128 = sld [smem:[#allocation3 + %s127]]
    %s129 = sshra.s32 %s128, 3
    %s130 = sand.u32 %s128, 7
    %s131 = sshra.s32 %s128, 3
    %s132 = sand.u32 %s128, 7
    %s133 = smul.u32 %s129, 4
    %s134 = smul.u32 %s133, 8
    %s135 = sadd.s32 %s134, %s132
    %s136 = scalar_lea.vmem [#allocation4], %s135
    %v137 = vld [vmem:[%s136] ss:$8 sm:$0xf]
    %s138 = scalar_lea.vmem [#allocation7], 7
    %139 = vst.msk [vmem:[%s138] ss:$8 sm:$0xf] %vm40, %v137
    %140 = vst.msk [vmem:[%s138] ss:$8 sm:$0x0] %vm40, %v137
    // Predicated region
    $region10: #{tpu_custom_call.1} parent=1 // pred_check
      _
    $region11: #{tpu_custom_call.1} parent=1 // pred_check_branch
      %142 = sbr.rel (0) target = $region13
    $region12: #{tpu_custom_call.1} parent=1 // pred_region
      %s144 = ssub.s32 512, 512
      %145 = vsyncadd [#allocation6], %s144
      %s147 = sshll.u32 [#allocation7], 4
      %s148 = int_to_ptr.vmem [resolvable:$true] %s147
      %150 = dma.vmem_to_hbm [thread:$0]  %s148, 512, %s2, [#allocation6]
    $region13: #{tpu_custom_call.1} parent=1 // pred_fallthru
      _
    // Predicated region
    $region14: #{tpu_custom_call.1} parent=1 // pred_check
      _
    $region15: #{tpu_custom_call.1} parent=1 // pred_check_branch
      %152 = sbr.rel (0) target = $region17
    $region16: #{tpu_custom_call.1} parent=1 // pred_region
      %153 = dma.done [#allocation6], 512
    $region17: #{tpu_custom_call.1} parent=1 // pred_fallthru
      _
    %154 = vsyncpa [#allocation5], 1
    %155 = vsyncpa [#allocation6], 1

</llo_original>
